<compile_context>
chip_gen: v6e
topology: v6e:2x2x1
jax: 0.10.0
libtpu: 0.0.40
codegen_flags: <defaults>
</compile_context>

<pallas_src>
import jax
import jax.numpy as jnp
import numpy as np
from jax.experimental import pallas as pl
from jax.experimental.pallas import tpu as pltpu

EPS = 1e-5


def _round_up(x, m):
    return ((x + m - 1) // m) * m


def _choose_tile(n_rows, tm_cap=512):
    """Row tile: one padded tile for small N; multiples of 256 (>=2 tiles)
    for large N so v6e/v7x MXUs are filled and both v7x cores get work."""
    n8 = _round_up(n_rows, 8)
    if n8 <= 256:
        return n8
    return min(tm_cap, _round_up(pl.cdiv(n8, 2), 256))


def decoder_kernel(x_ref,
                   w1_ref, b1_ref, g1_ref, be1_ref,
                   w2_ref, b2_ref, g2_ref, be2_ref,
                   wh_ref, bh_ref,
                   out_ref):
    x = x_ref[...]                                   # (tm, C) f32
    xb = x.astype(jnp.bfloat16)
    inv_c = 1.0 / x.shape[-1]

    # ---- LinearRes: linear1 -> GroupNorm(1) -> relu (GN math in f32) ----
    h = jnp.dot(xb, w1_ref[...], preferred_element_type=jnp.float32) + b1_ref[...]
    # Two independent row reductions (overlap on XLU): var = E[x^2] - E[x]^2.
    s1 = jnp.sum(h, axis=-1, keepdims=True)
    s2 = jnp.sum(h * h, axis=-1, keepdims=True)
    m = s1 * inv_c
    v = jnp.maximum(s2 * inv_c - m * m, 0.0)
    h = (h - m) * jax.lax.rsqrt(v + EPS)
    h = h * g1_ref[...] + be1_ref[...]
    h = jnp.maximum(h, 0.0)

    # ---- linear2 -> GroupNorm(1) -> +x (residual) -> relu ----
    h2 = jnp.dot(h.astype(jnp.bfloat16), w2_ref[...],
                 preferred_element_type=jnp.float32) + b2_ref[...]
    t1 = jnp.sum(h2, axis=-1, keepdims=True)
    t2 = jnp.sum(h2 * h2, axis=-1, keepdims=True)
    m2 = t1 * inv_c
    v2 = jnp.maximum(t2 * inv_c - m2 * m2, 0.0)
    h2 = (h2 - m2) * jax.lax.rsqrt(v2 + EPS)
    h2 = h2 * g2_ref[...] + be2_ref[...]
    hid = jnp.maximum(h2 + x, 0.0)

    # ---- fused generator+reconstructor head (lane-padded to 128) ----
    out_ref[...] = (jnp.dot(hid.astype(jnp.bfloat16), wh_ref[...],
                            preferred_element_type=jnp.float32)
                    + bh_ref[...])


def decoder_forward(actors, actor_idcs_mod, actor_ctrs_mod, params, num_preds,
                    tm=512):
    N, C = actors.shape
    P2 = 2 * num_preds
    HP = max(128, _round_up(2 * P2, 128))            # fused head lane width

    tm_eff = _choose_tile(N, tm)
    n_tiles = pl.cdiv(N, tm_eff)
    N_pad = n_tiles * tm_eff
    pad_rows = N_pad - N
    actors_p = jnp.pad(actors, ((0, pad_rows), (0, 0))) if pad_rows else actors

    # Fused head weights: generator in lanes [0, P2), reconstructor in
    # [P2, 2*P2), zeros after -> one dense 128-lane matmul + store.
    wh = jnp.zeros((C, HP), jnp.float32)
    wh = wh.at[:, :P2].set(params['wg']).at[:, P2:2 * P2].set(params['wr'])
    wh = wh.astype(jnp.bfloat16)
    bh = jnp.zeros((1, HP), jnp.float32)
    bh = bh.at[:, :P2].set(params['bg']).at[:, P2:2 * P2].set(params['br'])

    w1 = params['w1'].astype(jnp.bfloat16)
    w2 = params['w2'].astype(jnp.bfloat16)

    def full(shape):
        # Grid-invariant operand: fetched once, stays resident across tiles.
        return pl.BlockSpec(shape, lambda i: (0, 0))

    head_p = pl.pallas_call(
        decoder_kernel,
        out_shape=jax.ShapeDtypeStruct((N_pad, HP), jnp.float32),
        grid_spec=pltpu.PrefetchScalarGridSpec(
            num_scalar_prefetch=0,
            grid=(n_tiles,),
            in_specs=[
                pl.BlockSpec((tm_eff, C), lambda i: (i, 0)),             # actors tile
                full((C, C)), full((1, C)), full((1, C)), full((1, C)),  # lin1 + GN1
                full((C, C)), full((1, C)), full((1, C)), full((1, C)),  # lin2 + GN2
                full((C, HP)), full((1, HP)),                            # fused head
            ],
            out_specs=pl.BlockSpec((tm_eff, HP), lambda i: (i, 0))),
        compiler_params=pltpu.CompilerParams(dimension_semantics=("parallel",)),
    )(actors_p,
      w1, params['b1'], params['g1'], params['be1'],
      w2, params['b2'], params['g2'], params['be2'],
      wh, bh)

    # Per-actor center add outside the kernel (tiny O(N x P2) XLA add);
    # interleaved [x, y, x, y, ...] matches reg.view(N, 1, num_preds, 2) + ctrs.
    ctrs_all = jnp.concatenate(actor_ctrs_mod, axis=0)               # (N, 2)
    ctr_tiled = jnp.tile(ctrs_all, (1, num_preds))                   # (N, P2)
    reg = (head_p[:N, :P2] + ctr_tiled).reshape(N, 1, num_preds, 2)

    # Ego-row reconstruction: sliced straight out of the fused head lanes
    # [P2, 2*P2); vectorized device-side gather, no host syncs, no extra matmul.
    ego_idx = jnp.stack([idcs[0] for idcs in actor_idcs_mod]).astype(jnp.int32)
    ctrs0 = jnp.stack([c[0] for c in actor_ctrs_mod])                # (B, 2)
    rec = head_p[ego_idx, P2:2 * P2].reshape(-1, num_preds, 2) + ctrs0[:, None, :]

    # Glue: per-sample list outputs exactly as the PyTorch module produces.
    out = {'reconstruction': [], 'reg': []}
    for i, idcs in enumerate(actor_idcs_mod):
        out['reg'].append(reg[idcs])                 # (n_i, 1, num_preds, 2)
        out['reconstruction'].append(rec[i])         # (num_preds, 2)
    return out


def ref_forward(actors, actor_idcs_mod, actor_ctrs_mod, p, num_preds):
    """Pure-JAX reference of the PyTorch forward semantics (same deliberate
    mixed precision as the kernel: bf16 MXU operands, f32 accumulation/GN).
    A true-f32 PyTorch Decoder would differ by ~1e-2 relative from this."""
    bf16 = jnp.bfloat16

    def mm(a, w):
        return jnp.dot(a.astype(bf16), w.astype(bf16),
                       preferred_element_type=jnp.float32)

    def gn(h, g, b):
        m = h.mean(-1, keepdims=True)
        v = ((h - m) ** 2).mean(-1, keepdims=True)
        return (h - m) * jax.lax.rsqrt(v + EPS) * g + b

    h = jnp.maximum(gn(mm(actors, p['w1']) + p['b1'], p['g1'], p['be1']), 0.0)
    h2 = gn(mm(h, p['w2']) + p['b2'], p['g2'], p['be2'])
    hid = jnp.maximum(h2 + actors, 0.0)

    pred = mm(hid, p['wg']) + p['bg']
    ego_idx = jnp.stack([idcs[0] for idcs in actor_idcs_mod]).astype(jnp.int32)
    rec = mm(hid[ego_idx], p['wr']) + p['br']

    N = actors.shape[0]
    reg = pred.reshape(N, 1, num_preds, 2)
    reconstruction = rec.reshape(len(actor_idcs_mod), 1, num_preds, 2)
    out = {'reconstruction': [], 'reg': []}
    for i, idcs in enumerate(actor_idcs_mod):
        ctrs = actor_ctrs_mod[i].reshape(-1, 1, 1, 2)
        out['reg'].append(reg[idcs] + ctrs)
        out['reconstruction'].append((reconstruction[i] + ctrs[0])[0])
    return out


if __name__ == "__main__":
    n_actor = 128       # config['n_actor']
    num_preds = 6       # config['num_preds']
    counts = [6, 10]    # actors per batch sample (batch = 2)
    N = sum(counts)
    P2 = 2 * num_preds

    key = jax.random.PRNGKey(0)
    ks = jax.random.split(key, 16)

    actors = jax.random.normal(ks[0], (N, n_actor), jnp.float32)
    actor_idcs_mod = [jnp.arange(0, counts[0], dtype=jnp.int32),
                      jnp.arange(counts[0], N, dtype=jnp.int32)]
    actor_ctrs_mod = [jax.random.normal(ks[1], (counts[0], 2), jnp.float32),
                      jax.random.normal(ks[2], (counts[1], 2), jnp.float32)]

    s = 0.05
    params = {
        'w1':  s * jax.random.normal(ks[3], (n_actor, n_actor), jnp.float32),
        'b1':  s * jax.random.normal(ks[4], (1, n_actor), jnp.float32),
        'g1':  1.0 + s * jax.random.normal(ks[5], (1, n_actor), jnp.float32),
        'be1': s * jax.random.normal(ks[6], (1, n_actor), jnp.float32),
        'w2':  s * jax.random.normal(ks[7], (n_actor, n_actor), jnp.float32),
        'b2':  s * jax.random.normal(ks[8], (1, n_actor), jnp.float32),
        'g2':  1.0 + s * jax.random.normal(ks[9], (1, n_actor), jnp.float32),
        'be2': s * jax.random.normal(ks[10], (1, n_actor), jnp.float32),
        'wg':  s * jax.random.normal(ks[11], (n_actor, P2), jnp.float32),
        'bg':  s * jax.random.normal(ks[12], (1, P2), jnp.float32),
        'wr':  s * jax.random.normal(ks[13], (n_actor, P2), jnp.float32),
        'br':  s * jax.random.normal(ks[14], (1, P2), jnp.float32),
    }

    out = decoder_forward(actors, actor_idcs_mod, actor_ctrs_mod, params, num_preds)
    jax.block_until_ready(out['reg'])
    jax.block_until_ready(out['reconstruction'])

    ref = ref_forward(actors, actor_idcs_mod, actor_ctrs_mod, params, num_preds)
    for a, b in zip(out['reg'], ref['reg']):
        np.testing.assert_allclose(np.asarray(a), np.asarray(b), rtol=1e-3, atol=1e-3)
    for a, b in zip(out['reconstruction'], ref['reconstruction']):
        np.testing.assert_allclose(np.asarray(a), np.asarray(b), rtol=1e-3, atol=1e-3)

    print("KERNEL_OK")
</pallas_src>

<mosaic_0001>
module attributes {stable_mosaic.version = 11 : i64} {
  func.func @decoder_kernel(%arg0: i32, %arg1: memref<16x128xf32, #tpu.memory_space<vmem>>, %arg2: memref<128x128xbf16, #tpu.memory_space<vmem>>, %arg3: memref<1x128xf32, #tpu.memory_space<vmem>>, %arg4: memref<1x128xf32, #tpu.memory_space<vmem>>, %arg5: memref<1x128xf32, #tpu.memory_space<vmem>>, %arg6: memref<128x128xbf16, #tpu.memory_space<vmem>>, %arg7: memref<1x128xf32, #tpu.memory_space<vmem>>, %arg8: memref<1x128xf32, #tpu.memory_space<vmem>>, %arg9: memref<1x128xf32, #tpu.memory_space<vmem>>, %arg10: memref<128x128xbf16, #tpu.memory_space<vmem>>, %arg11: memref<1x128xf32, #tpu.memory_space<vmem>>, %arg12: memref<16x128xf32, #tpu.memory_space<vmem>>) attributes {dimension_semantics = [#tpu.dimension_semantics<parallel>], iteration_bounds = array<i64: 1>, scalar_prefetch = 0 : i64, scratch_operands = 0 : i64, tpu.core_type = #tpu.core_type<tc>, window_params = [{transform_indices = @transform_0, window_bounds = array<i64: 16, 128>}, {pipeline_mode = #tpu.pipeline_mode<synchronous>, transform_indices = @transform_1, window_bounds = array<i64: 128, 128>}, {pipeline_mode = #tpu.pipeline_mode<synchronous>, transform_indices = @transform_2, window_bounds = array<i64: 1, 128>}, {pipeline_mode = #tpu.pipeline_mode<synchronous>, transform_indices = @transform_3, window_bounds = array<i64: 1, 128>}, {pipeline_mode = #tpu.pipeline_mode<synchronous>, transform_indices = @transform_4, window_bounds = array<i64: 1, 128>}, {pipeline_mode = #tpu.pipeline_mode<synchronous>, transform_indices = @transform_5, window_bounds = array<i64: 128, 128>}, {pipeline_mode = #tpu.pipeline_mode<synchronous>, transform_indices = @transform_6, window_bounds = array<i64: 1, 128>}, {pipeline_mode = #tpu.pipeline_mode<synchronous>, transform_indices = @transform_7, window_bounds = array<i64: 1, 128>}, {pipeline_mode = #tpu.pipeline_mode<synchronous>, transform_indices = @transform_8, window_bounds = array<i64: 1, 128>}, {pipeline_mode = #tpu.pipeline_mode<synchronous>, transform_indices = @transform_9, window_bounds = array<i64: 128, 128>}, {pipeline_mode = #tpu.pipeline_mode<synchronous>, transform_indices = @transform_10, window_bounds = array<i64: 1, 128>}, {transform_indices = @transform_11, window_bounds = array<i64: 16, 128>}]} {
    %c0 = arith.constant 0 : index
    %c0_0 = arith.constant 0 : index
    %0 = vector.load %arg1[%c0, %c0_0] : memref<16x128xf32, #tpu.memory_space<vmem>>, vector<16x128xf32>
    %1 = arith.truncf %0 : vector<16x128xf32> to vector<16x128xbf16>
    %c0_1 = arith.constant 0 : index
    %c0_2 = arith.constant 0 : index
    %2 = vector.load %arg2[%c0_1, %c0_2] : memref<128x128xbf16, #tpu.memory_space<vmem>>, vector<128x128xbf16>
    %cst = arith.constant dense<0.000000e+00> : vector<16x128xf32>
    %3 = tpu.matmul %1, %2, %cst {dimension_numbers = #tpu.dot_dimension_numbers<[1], [0], [0], [1], [0, 0, 1, 1], [], []>} : vector<16x128xbf16>, vector<128x128xbf16>, vector<16x128xf32> -> vector<16x128xf32>
    %c0_3 = arith.constant 0 : index
    %c0_4 = arith.constant 0 : index
    %4 = vector.load %arg3[%c0_3, %c0_4] : memref<1x128xf32, #tpu.memory_space<vmem>>, vector<1x128xf32>
    %5 = vector.broadcast %4 : vector<1x128xf32> to vector<16x128xf32>
    %6 = arith.addf %3, %5 : vector<16x128xf32>
    %cst_5 = arith.constant dense<0.000000e+00> : vector<16xf32>
    %7 = vector.multi_reduction <add>, %6, %cst_5 [1] : vector<16x128xf32> to vector<16xf32>
    %8 = vector.shape_cast %7 : vector<16xf32> to vector<16x1xf32>
    %9 = arith.mulf %6, %6 : vector<16x128xf32>
    %cst_6 = arith.constant dense<0.000000e+00> : vector<16xf32>
    %10 = vector.multi_reduction <add>, %9, %cst_6 [1] : vector<16x128xf32> to vector<16xf32>
    %11 = vector.shape_cast %10 : vector<16xf32> to vector<16x1xf32>
    %cst_7 = arith.constant 7.812500e-03 : f32
    %12 = vector.broadcast %cst_7 : f32 to vector<16x1xf32>
    %13 = arith.mulf %8, %12 : vector<16x1xf32>
    %cst_8 = arith.constant 7.812500e-03 : f32
    %14 = vector.broadcast %cst_8 : f32 to vector<16x1xf32>
    %15 = arith.mulf %11, %14 : vector<16x1xf32>
    %16 = arith.mulf %13, %13 : vector<16x1xf32>
    %17 = arith.subf %15, %16 : vector<16x1xf32>
    %cst_9 = arith.constant 0.000000e+00 : f32
    %18 = vector.broadcast %cst_9 : f32 to vector<16x1xf32>
    %19 = arith.maximumf %17, %18 : vector<16x1xf32>
    %20 = vector.broadcast %13 : vector<16x1xf32> to vector<16x128xf32>
    %21 = arith.subf %6, %20 : vector<16x128xf32>
    %cst_10 = arith.constant 9.99999974E-6 : f32
    %22 = vector.broadcast %cst_10 : f32 to vector<16x1xf32>
    %23 = arith.addf %19, %22 : vector<16x1xf32>
    %24 = math.rsqrt %23 : vector<16x1xf32>
    %25 = vector.broadcast %24 : vector<16x1xf32> to vector<16x128xf32>
    %26 = arith.mulf %21, %25 : vector<16x128xf32>
    %c0_11 = arith.constant 0 : index
    %c0_12 = arith.constant 0 : index
    %27 = vector.load %arg4[%c0_11, %c0_12] : memref<1x128xf32, #tpu.memory_space<vmem>>, vector<1x128xf32>
    %28 = vector.broadcast %27 : vector<1x128xf32> to vector<16x128xf32>
    %29 = arith.mulf %26, %28 : vector<16x128xf32>
    %c0_13 = arith.constant 0 : index
    %c0_14 = arith.constant 0 : index
    %30 = vector.load %arg5[%c0_13, %c0_14] : memref<1x128xf32, #tpu.memory_space<vmem>>, vector<1x128xf32>
    %31 = vector.broadcast %30 : vector<1x128xf32> to vector<16x128xf32>
    %32 = arith.addf %29, %31 : vector<16x128xf32>
    %cst_15 = arith.constant 0.000000e+00 : f32
    %33 = vector.broadcast %cst_15 : f32 to vector<16x128xf32>
    %34 = arith.maximumf %32, %33 : vector<16x128xf32>
    %35 = arith.truncf %34 : vector<16x128xf32> to vector<16x128xbf16>
    %c0_16 = arith.constant 0 : index
    %c0_17 = arith.constant 0 : index
    %36 = vector.load %arg6[%c0_16, %c0_17] : memref<128x128xbf16, #tpu.memory_space<vmem>>, vector<128x128xbf16>
    %cst_18 = arith.constant dense<0.000000e+00> : vector<16x128xf32>
    %37 = tpu.matmul %35, %36, %cst_18 {dimension_numbers = #tpu.dot_dimension_numbers<[1], [0], [0], [1], [0, 0, 1, 1], [], []>} : vector<16x128xbf16>, vector<128x128xbf16>, vector<16x128xf32> -> vector<16x128xf32>
    %c0_19 = arith.constant 0 : index
    %c0_20 = arith.constant 0 : index
    %38 = vector.load %arg7[%c0_19, %c0_20] : memref<1x128xf32, #tpu.memory_space<vmem>>, vector<1x128xf32>
    %39 = vector.broadcast %38 : vector<1x128xf32> to vector<16x128xf32>
    %40 = arith.addf %37, %39 : vector<16x128xf32>
    %cst_21 = arith.constant dense<0.000000e+00> : vector<16xf32>
    %41 = vector.multi_reduction <add>, %40, %cst_21 [1] : vector<16x128xf32> to vector<16xf32>
    %42 = vector.shape_cast %41 : vector<16xf32> to vector<16x1xf32>
    %43 = arith.mulf %40, %40 : vector<16x128xf32>
    %cst_22 = arith.constant dense<0.000000e+00> : vector<16xf32>
    %44 = vector.multi_reduction <add>, %43, %cst_22 [1] : vector<16x128xf32> to vector<16xf32>
    %45 = vector.shape_cast %44 : vector<16xf32> to vector<16x1xf32>
    %cst_23 = arith.constant 7.812500e-03 : f32
    %46 = vector.broadcast %cst_23 : f32 to vector<16x1xf32>
    %47 = arith.mulf %42, %46 : vector<16x1xf32>
    %cst_24 = arith.constant 7.812500e-03 : f32
    %48 = vector.broadcast %cst_24 : f32 to vector<16x1xf32>
    %49 = arith.mulf %45, %48 : vector<16x1xf32>
    %50 = arith.mulf %47, %47 : vector<16x1xf32>
    %51 = arith.subf %49, %50 : vector<16x1xf32>
    %cst_25 = arith.constant 0.000000e+00 : f32
    %52 = vector.broadcast %cst_25 : f32 to vector<16x1xf32>
    %53 = arith.maximumf %51, %52 : vector<16x1xf32>
    %54 = vector.broadcast %47 : vector<16x1xf32> to vector<16x128xf32>
    %55 = arith.subf %40, %54 : vector<16x128xf32>
    %cst_26 = arith.constant 9.99999974E-6 : f32
    %56 = vector.broadcast %cst_26 : f32 to vector<16x1xf32>
    %57 = arith.addf %53, %56 : vector<16x1xf32>
    %58 = math.rsqrt %57 : vector<16x1xf32>
    %59 = vector.broadcast %58 : vector<16x1xf32> to vector<16x128xf32>
    %60 = arith.mulf %55, %59 : vector<16x128xf32>
    %c0_27 = arith.constant 0 : index
    %c0_28 = arith.constant 0 : index
    %61 = vector.load %arg8[%c0_27, %c0_28] : memref<1x128xf32, #tpu.memory_space<vmem>>, vector<1x128xf32>
    %62 = vector.broadcast %61 : vector<1x128xf32> to vector<16x128xf32>
    %63 = arith.mulf %60, %62 : vector<16x128xf32>
    %c0_29 = arith.constant 0 : index
    %c0_30 = arith.constant 0 : index
    %64 = vector.load %arg9[%c0_29, %c0_30] : memref<1x128xf32, #tpu.memory_space<vmem>>, vector<1x128xf32>
    %65 = vector.broadcast %64 : vector<1x128xf32> to vector<16x128xf32>
    %66 = arith.addf %63, %65 : vector<16x128xf32>
    %67 = arith.addf %66, %0 : vector<16x128xf32>
    %cst_31 = arith.constant 0.000000e+00 : f32
    %68 = vector.broadcast %cst_31 : f32 to vector<16x128xf32>
    %69 = arith.maximumf %67, %68 : vector<16x128xf32>
    %70 = arith.truncf %69 : vector<16x128xf32> to vector<16x128xbf16>
    %c0_32 = arith.constant 0 : index
    %c0_33 = arith.constant 0 : index
    %71 = vector.load %arg10[%c0_32, %c0_33] : memref<128x128xbf16, #tpu.memory_space<vmem>>, vector<128x128xbf16>
    %cst_34 = arith.constant dense<0.000000e+00> : vector<16x128xf32>
    %72 = tpu.matmul %70, %71, %cst_34 {dimension_numbers = #tpu.dot_dimension_numbers<[1], [0], [0], [1], [0, 0, 1, 1], [], []>} : vector<16x128xbf16>, vector<128x128xbf16>, vector<16x128xf32> -> vector<16x128xf32>
    %c0_35 = arith.constant 0 : index
    %c0_36 = arith.constant 0 : index
    %73 = vector.load %arg11[%c0_35, %c0_36] : memref<1x128xf32, #tpu.memory_space<vmem>>, vector<1x128xf32>
    %74 = vector.broadcast %73 : vector<1x128xf32> to vector<16x128xf32>
    %75 = arith.addf %72, %74 : vector<16x128xf32>
    %c0_37 = arith.constant 0 : index
    %c0_38 = arith.constant 0 : index
    %76 = vector.load %arg12[%c0_37, %c0_38] : memref<16x128xf32, #tpu.memory_space<vmem>>, vector<16x128xf32>
    tpu.vector_store %arg12[%c0_37, %c0_38], %75 {strides = array<i32>} : memref<16x128xf32, #tpu.memory_space<vmem>>, vector<16x128xf32>,
    return
  }
  func.func @transform_0(%arg0: i32) -> (i32, i32) {
    %c0_i32 = arith.constant 0 : i32
    %c0_i32_0 = arith.constant 0 : i32
    return %arg0, %c0_i32 : i32, i32
  }
  func.func @transform_1(%arg0: i32) -> (i32, i32) {
    %c0_i32 = arith.constant 0 : i32
    %c0_i32_0 = arith.constant 0 : i32
    %c0_i32_1 = arith.constant 0 : i32
    return %c0_i32, %c0_i32_0 : i32, i32
  }
  func.func @transform_2(%arg0: i32) -> (i32, i32) {
    %c0_i32 = arith.constant 0 : i32
    %c0_i32_0 = arith.constant 0 : i32
    %c0_i32_1 = arith.constant 0 : i32
    return %c0_i32, %c0_i32_0 : i32, i32
  }
  func.func @transform_3(%arg0: i32) -> (i32, i32) {
    %c0_i32 = arith.constant 0 : i32
    %c0_i32_0 = arith.constant 0 : i32
    %c0_i32_1 = arith.constant 0 : i32
    return %c0_i32, %c0_i32_0 : i32, i32
  }
  func.func @transform_4(%arg0: i32) -> (i32, i32) {
    %c0_i32 = arith.constant 0 : i32
    %c0_i32_0 = arith.constant 0 : i32
    %c0_i32_1 = arith.constant 0 : i32
    return %c0_i32, %c0_i32_0 : i32, i32
  }
  func.func @transform_5(%arg0: i32) -> (i32, i32) {
    %c0_i32 = arith.constant 0 : i32
    %c0_i32_0 = arith.constant 0 : i32
    %c0_i32_1 = arith.constant 0 : i32
    return %c0_i32, %c0_i32_0 : i32, i32
  }
  func.func @transform_6(%arg0: i32) -> (i32, i32) {
    %c0_i32 = arith.constant 0 : i32
    %c0_i32_0 = arith.constant 0 : i32
    %c0_i32_1 = arith.constant 0 : i32
    return %c0_i32, %c0_i32_0 : i32, i32
  }
  func.func @transform_7(%arg0: i32) -> (i32, i32) {
    %c0_i32 = arith.constant 0 : i32
    %c0_i32_0 = arith.constant 0 : i32
    %c0_i32_1 = arith.constant 0 : i32
    return %c0_i32, %c0_i32_0 : i32, i32
  }
  func.func @transform_8(%arg0: i32) -> (i32, i32) {
    %c0_i32 = arith.constant 0 : i32
    %c0_i32_0 = arith.constant 0 : i32
    %c0_i32_1 = arith.constant 0 : i32
    return %c0_i32, %c0_i32_0 : i32, i32
  }
  func.func @transform_9(%arg0: i32) -> (i32, i32) {
    %c0_i32 = arith.constant 0 : i32
    %c0_i32_0 = arith.constant 0 : i32
    %c0_i32_1 = arith.constant 0 : i32
    return %c0_i32, %c0_i32_0 : i32, i32
  }
  func.func @transform_10(%arg0: i32) -> (i32, i32) {
    %c0_i32 = arith.constant 0 : i32
    %c0_i32_0 = arith.constant 0 : i32
    %c0_i32_1 = arith.constant 0 : i32
    return %c0_i32, %c0_i32_0 : i32, i32
  }
  func.func @transform_11(%arg0: i32) -> (i32, i32) {
    %c0_i32 = arith.constant 0 : i32
    %c0_i32_0 = arith.constant 0 : i32
    return %arg0, %c0_i32 : i32, i32
  }
}

</mosaic_0001>

<llo_original>
// kernel: tpu_custom_call.1
$region0: #{tpu_custom_call.1}
  #allocation0 [shape = 'u32[]', space=smem, size = 0x4, offset = 0x4, fixed_abs, tag = 'smem constant byte address 0x4 - core index']
  #allocation1 [shape = 'u32[144,128]{1,0:T(1,128)}', space=vmem, size = 0x12000, scoped, tag = 'internal scratch']
  %s0 = inlined_call_operand.hbm [shape: f32[16,128], index: 0, kind: input, shape index: {}]
  %s1 = inlined_call_operand.hbm [shape: bf16[128,128], index: 1, kind: input, shape index: {}]
  %s2 = inlined_call_operand.vmem [shape: f32[1,128], index: 2, kind: input, shape index: {}]
  %s3 = inlined_call_operand.vmem [shape: f32[1,128], index: 3, kind: input, shape index: {}]
  %s4 = inlined_call_operand.vmem [shape: f32[1,128], index: 4, kind: input, shape index: {}]
  %s5 = inlined_call_operand.hbm [shape: bf16[128,128], index: 5, kind: input, shape index: {}]
  %s6 = inlined_call_operand.vmem [shape: f32[1,128], index: 6, kind: input, shape index: {}]
  %s7 = inlined_call_operand.vmem [shape: f32[1,128], index: 7, kind: input, shape index: {}]
  %s8 = inlined_call_operand.vmem [shape: f32[1,128], index: 8, kind: input, shape index: {}]
  %s9 = inlined_call_operand.hbm [shape: bf16[128,128], index: 9, kind: input, shape index: {}]
  %s10 = inlined_call_operand.vmem [shape: f32[1,128], index: 10, kind: input, shape index: {}]
  %s11 = inlined_call_operand.hbm [shape: f32[16,128], index: 11, kind: output, shape index: {}]
  %s12 = sld [smem:[#allocation0]]
  $region70: #{tpu_custom_call.1} parent=0
    _
  %s14 = ssub.s32 1, %s12
  %s15 = scalar_select 0, %s14, %s12
  $region1: #{tpu_custom_call.1} parent=0
    #allocation2 [shape = 'u8[8192]{0}', space=vmem, size = 0x2000, scoped, tag = 'input window, operand 0, single buffered']
    #allocation3 [shape = 's32[1]{0}', space=sflag, size = 0x4, scoped, tag = 'scoped memory for tpu_custom_call.1']
    #allocation4 [shape = 's32[1]{0}', space=sflag, size = 0x4, scoped, tag = 'scoped memory for tpu_custom_call.1']
    #allocation5 [shape = 'u8[32768]{0}', space=vmem, size = 0x8000, scoped, tag = 'input window, operand 1, single buffered']
    #allocation6 [shape = 's32[1]{0}', space=sflag, size = 0x4, scoped, tag = 'scoped memory for tpu_custom_call.1']
    #allocation7 [shape = 'u8[32768]{0}', space=vmem, size = 0x8000, scoped, tag = 'input window, operand 5, single buffered']
    #allocation8 [shape = 'u8[32768]{0}', space=vmem, size = 0x8000, scoped, tag = 'input window, operand 9, single buffered']
    #allocation9 [shape = 's32[1]{0}', space=sflag, size = 0x4, scoped, tag = 'scoped memory for tpu_custom_call.1']
    #allocation10 [shape = 'u8[8192]{0}', space=vmem, size = 0x2000, scoped, tag = 'output window, operand 0, single buffered']
    %16 = vsyncpa [#allocation3], 0
    %17 = vsyncpa [#allocation6], 0
    %18 = vsyncpa [#allocation9], 0
    %19 = vsyncpa [#allocation4], 0
    // Predicated region
    $region2: #{tpu_custom_call.1} parent=1 // pred_check
      _
    $region3: #{tpu_custom_call.1} parent=1 // pred_check_branch
      %21 = sbr.rel (0) target = $region5
    $region4: #{tpu_custom_call.1} parent=1 // pred_region
      %s23 = ssub.s32 256, 256
      %24 = vsyncadd [#allocation3], %s23
      %s25 = sshll.u32 [#allocation2], 4
      %s26 = int_to_ptr.vmem [resolvable:$true] %s25
      %31 = dma.hbm_to_vmem [thread:$0]  %s0, 256, %s26, [#allocation3], 128, 128, 8
    $region5: #{tpu_custom_call.1} parent=1 // pred_fallthru
      _
    // Predicated region
    $region6: #{tpu_custom_call.1} parent=1 // pred_check
      _
    $region7: #{tpu_custom_call.1} parent=1 // pred_check_branch
      %33 = sbr.rel (0) target = $region9
    $region8: #{tpu_custom_call.1} parent=1 // pred_region
      %s35 = ssub.s32 1024, 1024
      %36 = vsyncadd [#allocation6], %s35
      %s37 = sshll.u32 [#allocation5], 4
      %s38 = int_to_ptr.vmem [resolvable:$true] %s37
      %43 = dma.hbm_to_vmem [thread:$0]  %s1, 1024, %s38, [#allocation6], 64, 64, 4
    $region9: #{tpu_custom_call.1} parent=1 // pred_fallthru
      _
    // Predicated region
    $region10: #{tpu_custom_call.1} parent=1 // pred_check
      _
    $region11: #{tpu_custom_call.1} parent=1 // pred_check_branch
      %45 = sbr.rel (0) target = $region13
    $region12: #{tpu_custom_call.1} parent=1 // pred_region
      _
    $region13: #{tpu_custom_call.1} parent=1 // pred_fallthru
      _
    // Predicated region
    $region14: #{tpu_custom_call.1} parent=1 // pred_check
      _
    $region15: #{tpu_custom_call.1} parent=1 // pred_check_branch
      %47 = sbr.rel (0) target = $region17
    $region16: #{tpu_custom_call.1} parent=1 // pred_region
      _
    $region17: #{tpu_custom_call.1} parent=1 // pred_fallthru
      _
    // Predicated region
    $region18: #{tpu_custom_call.1} parent=1 // pred_check
      _
    $region19: #{tpu_custom_call.1} parent=1 // pred_check_branch
      %49 = sbr.rel (0) target = $region21
    $region20: #{tpu_custom_call.1} parent=1 // pred_region
      _
    $region21: #{tpu_custom_call.1} parent=1 // pred_fallthru
      _
    // Predicated region
    $region22: #{tpu_custom_call.1} parent=1 // pred_check
      _
    $region23: #{tpu_custom_call.1} parent=1 // pred_check_branch
      %51 = sbr.rel (0) target = $region25
    $region24: #{tpu_custom_call.1} parent=1 // pred_region
      %s53 = ssub.s32 1024, 1024
      %54 = vsyncadd [#allocation6], %s53
      %s55 = sshll.u32 [#allocation7], 4
      %s56 = int_to_ptr.vmem [resolvable:$true] %s55
      %61 = dma.hbm_to_vmem [thread:$0]  %s5, 1024, %s56, [#allocation6], 64, 64, 4
    $region25: #{tpu_custom_call.1} parent=1 // pred_fallthru
      _
    // Predicated region
    $region26: #{tpu_custom_call.1} parent=1 // pred_check
      _
    $region27: #{tpu_custom_call.1} parent=1 // pred_check_branch
      %63 = sbr.rel (0) target = $region29
    $region28: #{tpu_custom_call.1} parent=1 // pred_region
      _
    $region29: #{tpu_custom_call.1} parent=1 // pred_fallthru
      _
    // Predicated region
    $region30: #{tpu_custom_call.1} parent=1 // pred_check
      _
    $region31: #{tpu_custom_call.1} parent=1 // pred_check_branch
      %65 = sbr.rel (0) target = $region33
    $region32: #{tpu_custom_call.1} parent=1 // pred_region
      _
    $region33: #{tpu_custom_call.1} parent=1 // pred_fallthru
      _
    // Predicated region
    $region34: #{tpu_custom_call.1} parent=1 // pred_check
      _
    $region35: #{tpu_custom_call.1} parent=1 // pred_check_branch
      %67 = sbr.rel (0) target = $region37
    $region36: #{tpu_custom_call.1} parent=1 // pred_region
      _
    $region37: #{tpu_custom_call.1} parent=1 // pred_fallthru
      _
    // Predicated region
    $region38: #{tpu_custom_call.1} parent=1 // pred_check
      _
    $region39: #{tpu_custom_call.1} parent=1 // pred_check_branch
      %69 = sbr.rel (0) target = $region41
    $region40: #{tpu_custom_call.1} parent=1 // pred_region
      %s71 = ssub.s32 1024, 1024
      %72 = vsyncadd [#allocation9], %s71
      %s73 = sshll.u32 [#allocation8], 4
      %s74 = int_to_ptr.vmem [resolvable:$true] %s73
      %79 = dma.hbm_to_vmem [thread:$0]  %s9, 1024, %s74, [#allocation9], 64, 64, 4
    $region41: #{tpu_custom_call.1} parent=1 // pred_fallthru
      _
    // Predicated region
    $region42: #{tpu_custom_call.1} parent=1 // pred_check
      _
    $region43: #{tpu_custom_call.1} parent=1 // pred_check_branch
      %81 = sbr.rel (0) target = $region45
    $region44: #{tpu_custom_call.1} parent=1 // pred_region
      _
    $region45: #{tpu_custom_call.1} parent=1 // pred_fallthru
      _
    // Predicated region
    $region46: #{tpu_custom_call.1} parent=1 // pred_check
      _
    $region47: #{tpu_custom_call.1} parent=1 // pred_check_branch
      %83 = sbr.rel (0) target = $region49
    $region48: #{tpu_custom_call.1} parent=1 // pred_region
      %84 = dma.done [#allocation3], 256
    $region49: #{tpu_custom_call.1} parent=1 // pred_fallthru
      _
    // Predicated region
    $region50: #{tpu_custom_call.1} parent=1 // pred_check
      _
    $region51: #{tpu_custom_call.1} parent=1 // pred_check_branch
      %86 = sbr.rel (0) target = $region53
    $region52: #{tpu_custom_call.1} parent=1 // pred_region
      %87 = dma.done [#allocation6], 1024
    $region53: #{tpu_custom_call.1} parent=1 // pred_fallthru
      _
    // Predicated region
    $region54: #{tpu_custom_call.1} parent=1 // pred_check
      _
    $region55: #{tpu_custom_call.1} parent=1 // pred_check_branch
      %89 = sbr.rel (0) target = $region57
    $region56: #{tpu_custom_call.1} parent=1 // pred_region
      %90 = dma.done [#allocation6], 1024
    $region57: #{tpu_custom_call.1} parent=1 // pred_fallthru
      _
    // Predicated region
    $region58: #{tpu_custom_call.1} parent=1 // pred_check
      _
    $region59: #{tpu_custom_call.1} parent=1 // pred_check_branch
      %92 = sbr.rel (0) target = $region61
    $region60: #{tpu_custom_call.1} parent=1 // pred_region
      %93 = dma.done [#allocation9], 1024
    $region61: #{tpu_custom_call.1} parent=1 // pred_fallthru
      _
    %v95 = vld [vmem:[#allocation2] sm:$0xff]
    %v96 = vld [vmem:[#allocation2 + $0x8] sm:$0xff]
    %v97 = vpack.c.bf16 %v96, %v95
    %v98 = vld [vmem:[#allocation5] sm:$0xf]
    %v99 = vld [vmem:[#allocation5 + $0x4] sm:$0xf]
    %v100 = vld [vmem:[#allocation5 + $0x8] sm:$0xf]
    %v101 = vld [vmem:[#allocation5 + $0xc] sm:$0xf]
    %v102 = vld [vmem:[#allocation5 + $0x10] sm:$0xf]
    %v103 = vld [vmem:[#allocation5 + $0x14] sm:$0xf]
    %v104 = vld [vmem:[#allocation5 + $0x18] sm:$0xf]
    %v105 = vld [vmem:[#allocation5 + $0x1c] sm:$0xf]
    %v106 = vld [vmem:[#allocation5 + $0x20] sm:$0xf]
    %v107 = vld [vmem:[#allocation5 + $0x24] sm:$0xf]
    %v108 = vld [vmem:[#allocation5 + $0x28] sm:$0xf]
    %v109 = vld [vmem:[#allocation5 + $0x2c] sm:$0xf]
    %v110 = vld [vmem:[#allocation5 + $0x30] sm:$0xf]
    %v111 = vld [vmem:[#allocation5 + $0x34] sm:$0xf]
    %v112 = vld [vmem:[#allocation5 + $0x38] sm:$0xf]
    %v113 = vld [vmem:[#allocation5 + $0x3c] sm:$0xf]
    %v114 = vld [vmem:[%s2] sm:$0x1]
    %v116 = vlaneseq
    %v117 = vshrl.u32 %v116, 7
    %v118 = vsub.s32 0, %v117
    %v119 = vrot.slane %v114, %v118
    %v137 = vunpack.c.l.b16 %v98
    %v138 = vunpack.c.l.b16 %v99
    %v139 = vunpack.c.l.b16 %v100
    %v140 = vunpack.c.l.b16 %v101
    %v141 = vunpack.c.l.b16 %v102
    %v142 = vunpack.c.l.b16 %v103
    %v143 = vunpack.c.l.b16 %v104
    %v144 = vunpack.c.l.b16 %v105
    %v145 = vunpack.c.l.b16 %v106
    %v146 = vunpack.c.l.b16 %v107
    %v147 = vunpack.c.l.b16 %v108
    %v148 = vunpack.c.l.b16 %v109
    %v149 = vunpack.c.l.b16 %v110
    %v150 = vunpack.c.l.b16 %v111
    %v151 = vunpack.c.l.b16 %v112
    %v152 = vunpack.c.l.b16 %v113
    %v153 = vpack.c.b16 %v138, %v137
    %v154 = vpack.c.b16 %v140, %v139
    %v155 = vpack.c.b16 %v142, %v141
    %v156 = vpack.c.b16 %v144, %v143
    %v157 = vpack.c.b16 %v146, %v145
    %v158 = vpack.c.b16 %v148, %v147
    %v159 = vpack.c.b16 %v150, %v149
    %v160 = vpack.c.b16 %v152, %v151
    %169 = vmatprep.subr.bf16.mxu0 0
    %170 = vmatpush1.bf16.msra.mxu0 %v160
    %171 = vmatprep.subr.bf16.mxu0 0
    %172 = vmatpush1.bf16.msra.mxu0 %v159
    %173 = vmatprep.subr.bf16.mxu0 0
    %174 = vmatpush1.bf16.msra.mxu0 %v158
    %175 = vmatprep.subr.bf16.mxu0 0
    %176 = vmatpush1.bf16.msra.mxu0 %v157
    %177 = vmatprep.subr.bf16.mxu0 0
    %178 = vmatpush1.bf16.msra.mxu0 %v156
    %179 = vmatprep.subr.bf16.mxu0 0
    %180 = vmatpush1.bf16.msra.mxu0 %v155
    %181 = vmatprep.subr.bf16.mxu0 0
    %182 = vmatpush1.bf16.msra.mxu0 %v154
    %183 = vmatprep.subr.bf16.mxu0 0
    %184 = vmatpush1.bf16.msra.mxu0 %v153
    %185 = vmatprep.subr.bf16.mxu0 0
    %186 = vmatpush2.bf16.msra.mxu0 0
    %187 = vmatprep.subr.bf16.mxu0 0
    %188 = vmatpush2.bf16.msra.mxu0 0
    %189 = vmatprep.subr.bf16.mxu0 0
    %190 = vmatpush2.bf16.msra.mxu0 0
    %191 = vmatprep.subr.bf16.mxu0 0
    %192 = vmatpush2.bf16.msra.mxu0 0
    %193 = vmatprep.subr.bf16.mxu0 0
    %194 = vmatpush2.bf16.msra.mxu0 0
    %195 = vmatprep.subr.bf16.mxu0 0
    %196 = vmatpush2.bf16.msra.mxu0 0
    %197 = vmatprep.subr.bf16.mxu0 0
    %198 = vmatpush2.bf16.msra.mxu0 0
    %199 = vmatprep.subr.bf16.mxu0 0
    %200 = vmatpush2.bf16.msra.mxu0 0
    %201 = vmatprep.mubr.bf16.mxu0 0
    %202 = vmatmul.mubr.bf16.gmra.mxu0 %v97
    %v203 = vpop.f32.mrf.mxu0
    %v204 = vadd.f32 %v119, %v203
    %v205 = vpop.f32.mrf.mxu0
    %v206 = vpop.f32.mrf.mxu0
    %v207 = vadd.f32 %v119, %v206
    %v208 = vpop.f32.mrf.mxu0
    %209 = vdwg.mxu0
    %210 = vadd.xlane.f32.xlu0 %v204
    %v211 = vpop.xlane.xlu0 %210
    %212 = vadd.xlane.f32.xlu0 %v207
    %v213 = vpop.xlane.xlu0 %212
    %v214 = vmul.f32 %v204, %v204
    %v215 = vmul.f32 %v207, %v207
    %216 = vadd.xlane.f32.xlu0 %v214
    %v217 = vpop.xlane.xlu0 %216
    %218 = vadd.xlane.f32.xlu0 %v215
    %v219 = vpop.xlane.xlu0 %218
    %v220 = vmul.f32 %v211, 0.0078125
    %v221 = vmul.f32 %v213, 0.0078125
    %v222 = vmul.f32 %v217, 0.0078125
    %v223 = vmul.f32 %v219, 0.0078125
    %v224 = vmul.f32 %v220, %v220
    %v225 = vmul.f32 %v221, %v221
    %v226 = vsub.f32 %v222, %v224
    %v227 = vsub.f32 %v223, %v225
    %v228 = vmax.f32 %v226, 0.0
    %v229 = vmax.f32 %v227, 0.0
    %v230 = vsub.f32 %v204, %v220
    %v231 = vsub.f32 %v207, %v221
    %v232 = vadd.f32 %v228, 1e-05
    %v233 = vadd.f32 %v229, 1e-05
    %v234 = vrsqrt.pop %v232
    %v235 = vrsqrt.pop %v233
    %v236 = vmul.f32 %v230, %v234
    %v237 = vmul.f32 %v231, %v235
    %v238 = vld [vmem:[%s3] sm:$0x1]
    %v240 = vlaneseq
    %v241 = vshrl.u32 %v240, 7
    %v242 = vsub.s32 0, %v241
    %v243 = vrot.slane %v238, %v242
    %v245 = vmul.f32 %v236, %v243
    %v246 = vmul.f32 %v237, %v243
    %v247 = vld [vmem:[%s4] sm:$0x1]
    %v249 = vlaneseq
    %v250 = vshrl.u32 %v249, 7
    %v251 = vsub.s32 0, %v250
    %v252 = vrot.slane %v247, %v251
    %v254 = vadd.f32 %v245, %v252
    %v255 = vadd.f32 %v246, %v252
    %v256 = vmax.f32 %v254, 0.0
    %v257 = vmax.f32 %v255, 0.0
    %v258 = vpack.c.bf16 %v257, %v256
    %v259 = vld [vmem:[#allocation7] sm:$0xf]
    %v260 = vld [vmem:[#allocation7 + $0x4] sm:$0xf]
    %v261 = vld [vmem:[#allocation7 + $0x8] sm:$0xf]
    %v262 = vld [vmem:[#allocation7 + $0xc] sm:$0xf]
    %v263 = vld [vmem:[#allocation7 + $0x10] sm:$0xf]
    %v264 = vld [vmem:[#allocation7 + $0x14] sm:$0xf]
    %v265 = vld [vmem:[#allocation7 + $0x18] sm:$0xf]
    %v266 = vld [vmem:[#allocation7 + $0x1c] sm:$0xf]
    %v267 = vld [vmem:[#allocation7 + $0x20] sm:$0xf]
    %v268 = vld [vmem:[#allocation7 + $0x24] sm:$0xf]
    %v269 = vld [vmem:[#allocation7 + $0x28] sm:$0xf]
    %v270 = vld [vmem:[#allocation7 + $0x2c] sm:$0xf]
    %v271 = vld [vmem:[#allocation7 + $0x30] sm:$0xf]
    %v272 = vld [vmem:[#allocation7 + $0x34] sm:$0xf]
    %v273 = vld [vmem:[#allocation7 + $0x38] sm:$0xf]
    %v274 = vld [vmem:[#allocation7 + $0x3c] sm:$0xf]
    %v275 = vld [vmem:[%s6] sm:$0x1]
    %v277 = vlaneseq
    %v278 = vshrl.u32 %v277, 7
    %v279 = vsub.s32 0, %v278
    %v280 = vrot.slane %v275, %v279
    %v298 = vunpack.c.l.b16 %v259
    %v299 = vunpack.c.l.b16 %v260
    %v300 = vunpack.c.l.b16 %v261
    %v301 = vunpack.c.l.b16 %v262
    %v302 = vunpack.c.l.b16 %v263
    %v303 = vunpack.c.l.b16 %v264
    %v304 = vunpack.c.l.b16 %v265
    %v305 = vunpack.c.l.b16 %v266
    %v306 = vunpack.c.l.b16 %v267
    %v307 = vunpack.c.l.b16 %v268
    %v308 = vunpack.c.l.b16 %v269
    %v309 = vunpack.c.l.b16 %v270
    %v310 = vunpack.c.l.b16 %v271
    %v311 = vunpack.c.l.b16 %v272
    %v312 = vunpack.c.l.b16 %v273
    %v313 = vunpack.c.l.b16 %v274
    %v314 = vpack.c.b16 %v299, %v298
    %v315 = vpack.c.b16 %v301, %v300
    %v316 = vpack.c.b16 %v303, %v302
    %v317 = vpack.c.b16 %v305, %v304
    %v318 = vpack.c.b16 %v307, %v306
    %v319 = vpack.c.b16 %v309, %v308
    %v320 = vpack.c.b16 %v311, %v310
    %v321 = vpack.c.b16 %v313, %v312
    %330 = vmatprep.subr.bf16.mxu0 0
    %331 = vmatpush1.bf16.msra.mxu0 %v321
    %332 = vmatprep.subr.bf16.mxu0 0
    %333 = vmatpush1.bf16.msra.mxu0 %v320
    %334 = vmatprep.subr.bf16.mxu0 0
    %335 = vmatpush1.bf16.msra.mxu0 %v319
    %336 = vmatprep.subr.bf16.mxu0 0
    %337 = vmatpush1.bf16.msra.mxu0 %v318
    %338 = vmatprep.subr.bf16.mxu0 0
    %339 = vmatpush1.bf16.msra.mxu0 %v317
    %340 = vmatprep.subr.bf16.mxu0 0
    %341 = vmatpush1.bf16.msra.mxu0 %v316
    %342 = vmatprep.subr.bf16.mxu0 0
    %343 = vmatpush1.bf16.msra.mxu0 %v315
    %344 = vmatprep.subr.bf16.mxu0 0
    %345 = vmatpush1.bf16.msra.mxu0 %v314
    %346 = vmatprep.subr.bf16.mxu0 0
    %347 = vmatpush2.bf16.msra.mxu0 0
    %348 = vmatprep.subr.bf16.mxu0 0
    %349 = vmatpush2.bf16.msra.mxu0 0
    %350 = vmatprep.subr.bf16.mxu0 0
    %351 = vmatpush2.bf16.msra.mxu0 0
    %352 = vmatprep.subr.bf16.mxu0 0
    %353 = vmatpush2.bf16.msra.mxu0 0
    %354 = vmatprep.subr.bf16.mxu0 0
    %355 = vmatpush2.bf16.msra.mxu0 0
    %356 = vmatprep.subr.bf16.mxu0 0
    %357 = vmatpush2.bf16.msra.mxu0 0
    %358 = vmatprep.subr.bf16.mxu0 0
    %359 = vmatpush2.bf16.msra.mxu0 0
    %360 = vmatprep.subr.bf16.mxu0 0
    %361 = vmatpush2.bf16.msra.mxu0 0
    %362 = vmatprep.mubr.bf16.mxu0 0
    %363 = vmatmul.mubr.bf16.gmra.mxu0 %v258
    %v364 = vpop.f32.mrf.mxu0
    %v365 = vadd.f32 %v280, %v364
    %v366 = vpop.f32.mrf.mxu0
    %v367 = vpop.f32.mrf.mxu0
    %v368 = vadd.f32 %v280, %v367
    %v369 = vpop.f32.mrf.mxu0
    %370 = vdwg.mxu0
    %371 = vadd.xlane.f32.xlu0 %v365
    %v372 = vpop.xlane.xlu0 %371
    %373 = vadd.xlane.f32.xlu0 %v368
    %v374 = vpop.xlane.xlu0 %373
    %v375 = vmul.f32 %v365, %v365
    %v376 = vmul.f32 %v368, %v368
    %377 = vadd.xlane.f32.xlu0 %v375
    %v378 = vpop.xlane.xlu0 %377
    %379 = vadd.xlane.f32.xlu0 %v376
    %v380 = vpop.xlane.xlu0 %379
    %v381 = vmul.f32 %v372, 0.0078125
    %v382 = vmul.f32 %v374, 0.0078125
    %v383 = vmul.f32 %v378, 0.0078125
    %v384 = vmul.f32 %v380, 0.0078125
    %v385 = vmul.f32 %v381, %v381
    %v386 = vmul.f32 %v382, %v382
    %v387 = vsub.f32 %v383, %v385
    %v388 = vsub.f32 %v384, %v386
    %v389 = vmax.f32 %v387, 0.0
    %v390 = vmax.f32 %v388, 0.0
    %v391 = vsub.f32 %v365, %v381
    %v392 = vsub.f32 %v368, %v382
    %v393 = vadd.f32 %v389, 1e-05
    %v394 = vadd.f32 %v390, 1e-05
    %v395 = vrsqrt.pop %v393
    %v396 = vrsqrt.pop %v394
    %v397 = vmul.f32 %v391, %v395
    %v398 = vmul.f32 %v392, %v396
    %v399 = vld [vmem:[%s7] sm:$0x1]
    %v401 = vlaneseq
    %v402 = vshrl.u32 %v401, 7
    %v403 = vsub.s32 0, %v402
    %v404 = vrot.slane %v399, %v403
    %v406 = vmul.f32 %v397, %v404
    %v407 = vmul.f32 %v398, %v404
    %v408 = vld [vmem:[%s8] sm:$0x1]
    %v410 = vlaneseq
    %v411 = vshrl.u32 %v410, 7
    %v412 = vsub.s32 0, %v411
    %v413 = vrot.slane %v408, %v412
    %v415 = vadd.f32 %v406, %v413
    %v416 = vadd.f32 %v407, %v413
    %v417 = vadd.f32 %v415, %v95
    %v418 = vadd.f32 %v416, %v96
    %v419 = vmax.f32 %v417, 0.0
    %v420 = vmax.f32 %v418, 0.0
    %v421 = vpack.c.bf16 %v420, %v419
    %v422 = vld [vmem:[#allocation8] sm:$0xf]
    %v423 = vld [vmem:[#allocation8 + $0x4] sm:$0xf]
    %v424 = vld [vmem:[#allocation8 + $0x8] sm:$0xf]
    %v425 = vld [vmem:[#allocation8 + $0xc] sm:$0xf]
    %v426 = vld [vmem:[#allocation8 + $0x10] sm:$0xf]
    %v427 = vld [vmem:[#allocation8 + $0x14] sm:$0xf]
    %v428 = vld [vmem:[#allocation8 + $0x18] sm:$0xf]
    %v429 = vld [vmem:[#allocation8 + $0x1c] sm:$0xf]
    %v430 = vld [vmem:[#allocation8 + $0x20] sm:$0xf]
    %v431 = vld [vmem:[#allocation8 + $0x24] sm:$0xf]
    %v432 = vld [vmem:[#allocation8 + $0x28] sm:$0xf]
    %v433 = vld [vmem:[#allocation8 + $0x2c] sm:$0xf]
    %v434 = vld [vmem:[#allocation8 + $0x30] sm:$0xf]
    %v435 = vld [vmem:[#allocation8 + $0x34] sm:$0xf]
    %v436 = vld [vmem:[#allocation8 + $0x38] sm:$0xf]
    %v437 = vld [vmem:[#allocation8 + $0x3c] sm:$0xf]
    %v438 = vld [vmem:[%s10] sm:$0x1]
    %v440 = vlaneseq
    %v441 = vshrl.u32 %v440, 7
    %v442 = vsub.s32 0, %v441
    %v443 = vrot.slane %v438, %v442
    %v461 = vunpack.c.l.b16 %v422
    %v462 = vunpack.c.l.b16 %v423
    %v463 = vunpack.c.l.b16 %v424
    %v464 = vunpack.c.l.b16 %v425
    %v465 = vunpack.c.l.b16 %v426
    %v466 = vunpack.c.l.b16 %v427
    %v467 = vunpack.c.l.b16 %v428
    %v468 = vunpack.c.l.b16 %v429
    %v469 = vunpack.c.l.b16 %v430
    %v470 = vunpack.c.l.b16 %v431
    %v471 = vunpack.c.l.b16 %v432
    %v472 = vunpack.c.l.b16 %v433
    %v473 = vunpack.c.l.b16 %v434
    %v474 = vunpack.c.l.b16 %v435
    %v475 = vunpack.c.l.b16 %v436
    %v476 = vunpack.c.l.b16 %v437
    %v477 = vpack.c.b16 %v462, %v461
    %v478 = vpack.c.b16 %v464, %v463
    %v479 = vpack.c.b16 %v466, %v465
    %v480 = vpack.c.b16 %v468, %v467
    %v481 = vpack.c.b16 %v470, %v469
    %v482 = vpack.c.b16 %v472, %v471
    %v483 = vpack.c.b16 %v474, %v473
    %v484 = vpack.c.b16 %v476, %v475
    %493 = vmatprep.subr.bf16.mxu0 0
    %494 = vmatpush1.bf16.msra.mxu0 %v484
    %495 = vmatprep.subr.bf16.mxu0 0
    %496 = vmatpush1.bf16.msra.mxu0 %v483
    %497 = vmatprep.subr.bf16.mxu0 0
    %498 = vmatpush1.bf16.msra.mxu0 %v482
    %499 = vmatprep.subr.bf16.mxu0 0
    %500 = vmatpush1.bf16.msra.mxu0 %v481
    %501 = vmatprep.subr.bf16.mxu0 0
    %502 = vmatpush1.bf16.msra.mxu0 %v480
    %503 = vmatprep.subr.bf16.mxu0 0
    %504 = vmatpush1.bf16.msra.mxu0 %v479
    %505 = vmatprep.subr.bf16.mxu0 0
    %506 = vmatpush1.bf16.msra.mxu0 %v478
    %507 = vmatprep.subr.bf16.mxu0 0
    %508 = vmatpush1.bf16.msra.mxu0 %v477
    %509 = vmatprep.subr.bf16.mxu0 0
    %510 = vmatpush2.bf16.msra.mxu0 0
    %511 = vmatprep.subr.bf16.mxu0 0
    %512 = vmatpush2.bf16.msra.mxu0 0
    %513 = vmatprep.subr.bf16.mxu0 0
    %514 = vmatpush2.bf16.msra.mxu0 0
    %515 = vmatprep.subr.bf16.mxu0 0
    %516 = vmatpush2.bf16.msra.mxu0 0
    %517 = vmatprep.subr.bf16.mxu0 0
    %518 = vmatpush2.bf16.msra.mxu0 0
    %519 = vmatprep.subr.bf16.mxu0 0
    %520 = vmatpush2.bf16.msra.mxu0 0
    %521 = vmatprep.subr.bf16.mxu0 0
    %522 = vmatpush2.bf16.msra.mxu0 0
    %523 = vmatprep.subr.bf16.mxu0 0
    %524 = vmatpush2.bf16.msra.mxu0 0
    %525 = vmatprep.mubr.bf16.mxu0 0
    %526 = vmatmul.mubr.bf16.gmra.mxu0 %v421
    %v527 = vpop.f32.mrf.mxu0
    %v528 = vadd.f32 %v443, %v527
    %v529 = vpop.f32.mrf.mxu0
    %v530 = vpop.f32.mrf.mxu0
    %v531 = vadd.f32 %v443, %v530
    %v532 = vpop.f32.mrf.mxu0
    %533 = vdwg.mxu0
    %534 = vst [vmem:[#allocation10] sm:$0xff] %v528
    %535 = vst [vmem:[#allocation10 + $0x8] sm:$0xff] %v531
    // Predicated region
    $region62: #{tpu_custom_call.1} parent=1 // pred_check
      _
    $region63: #{tpu_custom_call.1} parent=1 // pred_check_branch
      %537 = sbr.rel (0) target = $region65
    $region64: #{tpu_custom_call.1} parent=1 // pred_region
      %s539 = ssub.s32 256, 256
      %540 = vsyncadd [#allocation4], %s539
      %s541 = sshll.u32 [#allocation10], 4
      %s542 = int_to_ptr.vmem [resolvable:$true] %s541
      %547 = dma.vmem_to_hbm [thread:$0]  %s542, 256, %s11, [#allocation4], 128, 128, 8
    $region65: #{tpu_custom_call.1} parent=1 // pred_fallthru
      _
    // Predicated region
    $region66: #{tpu_custom_call.1} parent=1 // pred_check
      _
    $region67: #{tpu_custom_call.1} parent=1 // pred_check_branch
      %549 = sbr.rel (0) target = $region69
    $region68: #{tpu_custom_call.1} parent=1 // pred_region
      %550 = dma.done [#allocation4], 256
    $region69: #{tpu_custom_call.1} parent=1 // pred_fallthru
      _
    %551 = vsyncpa [#allocation3], 1
    %552 = vsyncpa [#allocation6], 1
    %553 = vsyncpa [#allocation9], 1
    %554 = vsyncpa [#allocation4], 1

</llo_original>
